<compile_context>
chip_gen: v5e
topology: v5e:2x2
jax: 0.10.0
libtpu: 0.0.40
codegen_flags: <defaults>
</compile_context>

<pallas_src>
import jax
import jax.numpy as jnp
from jax import lax
from jax.experimental import pallas as pl
from jax.experimental.pallas import tpu as pltpu

_LANES = 128


def _default_num_cores():
    """2 grid-parallel lanes on v7x (2 TensorCores/chip), else 1."""
    try:
        kind = jax.devices()[0].device_kind.lower()
    except Exception:
        return 1
    if "v7" in kind:
        return 2
    return 1


def _make_kernel(tile_rows, steps_per_core, num_blocks, rows_in_last, has_phantom):
    """Kernel closure over static tiling parameters."""
    need_tail_mask = rows_in_last < tile_rows

    def _accumulate(pred_ref, tgt_ref, sum_ref, cnt_ref, tail_mask=None):
        # Load native dtype, cast to f32 in-register; accumulate in f32.
        t = tgt_ref[...].astype(jnp.float32)
        p = pred_ref[...].astype(jnp.float32)
        valid = t > 0.0
        if tail_mask is not None:
            valid = valid & tail_mask
        diff = jnp.where(valid, jnp.abs(t - p), 0.0)
        ones = jnp.where(valid, 1.0, 0.0)
        # In-register reduce (tr, 128) -> (8, 128): the reshape only splits the
        # sublane dim into exact (8, 128) tiles (layout-preserving), and the
        # sum over axis 0 is a chain of sublane-aligned VPU adds.  Only the
        # tiny (8, 128) partial touches the resident accumulator blocks.
        sum_ref[...] += diff.reshape(-1, 8, _LANES).sum(axis=0)[None]
        cnt_ref[...] += ones.reshape(-1, 8, _LANES).sum(axis=0)[None]

    def kernel(pred_ref, tgt_ref, sum_ref, cnt_ref):
        c = pl.program_id(0)   # core / "parallel" axis
        i = pl.program_id(1)   # reduction / "arbitrary" axis

        # Zero this core's resident accumulator blocks on its first step.
        @pl.when(i == 0)
        def _():
            sum_ref[...] = jnp.zeros_like(sum_ref)
            cnt_ref[...] = jnp.zeros_like(cnt_ref)

        logical_block = c * steps_per_core + i

        if need_tail_mask:
            # Steady state: full tiles, plain target>0 mask only.
            @pl.when(logical_block < num_blocks - 1)
            def _():
                _accumulate(pred_ref, tgt_ref, sum_ref, cnt_ref)

            # Last real block: apply the partial-tile row mask (static offset,
            # so the iota compare uses a small local index — no overflow).
            @pl.when(logical_block == num_blocks - 1)
            def _():
                local = lax.broadcasted_iota(jnp.int32, (tile_rows, _LANES), 0)
                _accumulate(pred_ref, tgt_ref, sum_ref, cnt_ref,
                            tail_mask=local < rows_in_last)
            # Phantom clamped blocks (logical_block >= num_blocks): no branch
            # fires, contribution is exactly zero.
        elif has_phantom:
            @pl.when(logical_block < num_blocks)
            def _():
                _accumulate(pred_ref, tgt_ref, sum_ref, cnt_ref)
        else:
            # nc * steps == num_blocks and the last block is full: no gating
            # at all on the steady-state path.
            _accumulate(pred_ref, tgt_ref, sum_ref, cnt_ref)

    return kernel


def masked_l1_loss(pred, target, *, tile_rows=None, num_cores=None):
    assert pred.ndim == target.ndim, "inconsistent dimensions"
    assert pred.shape == target.shape, "inconsistent shapes"

    n = 1
    for d in pred.shape:
        n *= int(d)
    if n == 0:
        # torch: mean over an empty selection -> NaN.
        return jnp.asarray(jnp.nan, dtype=jnp.float32)

    if num_cores is None:
        num_cores = _default_num_cores()
    if tile_rows is None:
        tile_rows = 4096 if num_cores > 1 else 2048

    pred_f = pred.reshape(-1)
    tgt_f = target.reshape(-1)

    # Only lane-pad when n is not a multiple of 128 (padded target == 0 is
    # masked out by target > 0).  Common case: no copy.
    rem = n % _LANES
    if rem:
        pad = _LANES - rem
        pred_f = jnp.pad(pred_f, (0, pad))
        tgt_f = jnp.pad(tgt_f, (0, pad))
    rows = pred_f.shape[0] // _LANES
    assert rows < 2 ** 31, "input too large for int32 row indexing"

    pred2 = pred_f.reshape(rows, _LANES)
    tgt2 = tgt_f.reshape(rows, _LANES)

    # Tile rows: multiple of 8 sublanes, clamped to the (rounded-up) data.
    tr = min(tile_rows, ((rows + 7) // 8) * 8)
    tr = max(8, (tr // 8) * 8)

    num_blocks = pl.cdiv(rows, tr)
    nc = max(1, min(num_cores, num_blocks))
    steps = pl.cdiv(num_blocks, nc)
    has_phantom = nc * steps > num_blocks
    rows_in_last = rows - (num_blocks - 1) * tr   # in (0, tr]

    def in_index(c, i):
        # Clamp so phantom logical blocks past the end re-read the last real
        # block; their compute is skipped inside the kernel (at most nc-1 such
        # blocks per call).
        return (jnp.minimum(c * steps + i, num_blocks - 1), 0)

    kernel = _make_kernel(tr, steps, num_blocks, rows_in_last, has_phantom)

    sums, cnts = pl.pallas_call(
        kernel,
        out_shape=(
            jax.ShapeDtypeStruct((nc, 8, _LANES), jnp.float32),
            jax.ShapeDtypeStruct((nc, 8, _LANES), jnp.float32),
        ),
        grid_spec=pltpu.PrefetchScalarGridSpec(
            num_scalar_prefetch=0,
            grid=(nc, steps),
            in_specs=[
                pl.BlockSpec((tr, _LANES), in_index),
                pl.BlockSpec((tr, _LANES), in_index),
            ],
            out_specs=(
                pl.BlockSpec((1, 8, _LANES), lambda c, i: (c, 0, 0)),
                pl.BlockSpec((1, 8, _LANES), lambda c, i: (c, 0, 0)),
            ),
        ),
        compiler_params=pltpu.CompilerParams(
            dimension_semantics=("parallel", "arbitrary"),
        ),
    )(pred2, tgt2)

    # Final exact-ish cross-lane reduce + divide on tiny (nc, 8, 128) partials.
    # (f32 is fine here: only nc*1024 values; per-cell kernel accumulation is
    # exact up to ~2^24 increments per cell, i.e. n up to ~1.7e10.)
    # 0/0 -> NaN, matching torch's mean over an empty selection.
    return jnp.sum(sums) / jnp.sum(cnts)


def _reference(pred, target):
    mask = target > 0
    diff = jnp.abs(target.astype(jnp.float32) - pred.astype(jnp.float32))
    return jnp.sum(jnp.where(mask, diff, 0.0)) / jnp.sum(mask.astype(jnp.float32))


if __name__ == "__main__":
    key = jax.random.PRNGKey(0)
    k1, k2, k3, k4 = jax.random.split(key, 4)

    # 1) Small NCHW input consistent with a depth-prediction style module.
    shape = (2, 4, 16, 16)
    pred = jax.random.normal(k1, shape, dtype=jnp.float32)
    target = jax.random.normal(k2, shape, dtype=jnp.float32)  # ~50% valid (>0)

    loss = jax.block_until_ready(masked_l1_loss(pred, target))
    ref = _reference(pred, target)
    assert jnp.allclose(loss, ref, rtol=1e-5, atol=1e-6), (loss, ref)

    # 2) Ragged size (not a multiple of 128), several row-tiles, partial last
    #    tile — exercises the tail-mask branch.
    shape2 = (3, 5, 33, 17)
    pred_b = jax.random.normal(k3, shape2, dtype=jnp.float32)
    target_b = jax.random.normal(k4, shape2, dtype=jnp.float32)
    loss_b = jax.block_until_ready(masked_l1_loss(pred_b, target_b, tile_rows=16))
    ref_b = _reference(pred_b, target_b)
    assert jnp.allclose(loss_b, ref_b, rtol=1e-5, atol=1e-6), (loss_b, ref_b)

    # 3) Force nc=2 (odd block count -> one phantom clamped block) — exercises
    #    the multi-core split + compute-skip path; also correct on 1-TC chips.
    loss_c = jax.block_until_ready(
        masked_l1_loss(pred_b, target_b, tile_rows=16, num_cores=2))
    assert jnp.allclose(loss_c, ref_b, rtol=1e-5, atol=1e-6), (loss_c, ref_b)

    # 4) bf16 inputs: native-dtype DMA + in-register f32 cast.
    pred_h = pred.astype(jnp.bfloat16)
    target_h = target.astype(jnp.bfloat16)
    loss_h = jax.block_until_ready(masked_l1_loss(pred_h, target_h))
    ref_h = _reference(pred_h, target_h)
    assert jnp.allclose(loss_h, ref_h, rtol=1e-5, atol=1e-6), (loss_h, ref_h)

    # 5) No valid element -> NaN (matches torch's empty mean).
    loss_nan = jax.block_until_ready(
        masked_l1_loss(pred, -jnp.abs(target) - 1.0))
    assert bool(jnp.isnan(loss_nan)), loss_nan

    print("KERNEL_OK")
</pallas_src>

<mosaic_0001>
module attributes {stable_mosaic.version = 11 : i64} {
  func.func @kernel(%arg0: i32, %arg1: i32, %arg2: memref<16x128xf32, #tpu.memory_space<vmem>>, %arg3: memref<16x128xf32, #tpu.memory_space<vmem>>, %arg4: memref<1x8x128xf32, #tpu.memory_space<vmem>>, %arg5: memref<1x8x128xf32, #tpu.memory_space<vmem>>) attributes {dimension_semantics = [#tpu.dimension_semantics<parallel>, #tpu.dimension_semantics<arbitrary>], iteration_bounds = array<i64: 1, 1>, scalar_prefetch = 0 : i64, scratch_operands = 0 : i64, tpu.core_type = #tpu.core_type<tc>, window_params = [{transform_indices = @transform_0, window_bounds = array<i64: 16, 128>}, {transform_indices = @transform_1, window_bounds = array<i64: 16, 128>}, {transform_indices = @transform_2, window_bounds = array<i64: 1, 8, 128>}, {transform_indices = @transform_3, window_bounds = array<i64: 1, 8, 128>}]} {
    %c0_i32 = arith.constant 0 : i32
    %0 = arith.cmpi eq, %arg1, %c0_i32 : i32
    %1 = arith.extui %0 : i1 to i32
    %c0_i32_0 = arith.constant 0 : i32
    %2 = arith.cmpi ne, %1, %c0_i32_0 : i32
    scf.if %2 {
      %cst_21 = arith.constant 0.000000e+00 : f32
      %26 = vector.broadcast %cst_21 : f32 to vector<1x8x128xf32>
      %c0_22 = arith.constant 0 : index
      %c0_23 = arith.constant 0 : index
      %c0_24 = arith.constant 0 : index
      %27 = vector.load %arg4[%c0_22, %c0_23, %c0_24] : memref<1x8x128xf32, #tpu.memory_space<vmem>>, vector<1x8x128xf32>
      tpu.vector_store %arg4[%c0_22, %c0_23, %c0_24], %26 {strides = array<i32>} : memref<1x8x128xf32, #tpu.memory_space<vmem>>, vector<1x8x128xf32>,
      %cst_25 = arith.constant 0.000000e+00 : f32
      %28 = vector.broadcast %cst_25 : f32 to vector<1x8x128xf32>
      %c0_26 = arith.constant 0 : index
      %c0_27 = arith.constant 0 : index
      %c0_28 = arith.constant 0 : index
      %29 = vector.load %arg5[%c0_26, %c0_27, %c0_28] : memref<1x8x128xf32, #tpu.memory_space<vmem>>, vector<1x8x128xf32>
      tpu.vector_store %arg5[%c0_26, %c0_27, %c0_28], %28 {strides = array<i32>} : memref<1x8x128xf32, #tpu.memory_space<vmem>>, vector<1x8x128xf32>,
    } else {
    }
    %c0 = arith.constant 0 : index
    %c0_1 = arith.constant 0 : index
    %3 = vector.load %arg3[%c0, %c0_1] : memref<16x128xf32, #tpu.memory_space<vmem>>, vector<16x128xf32>
    %c0_2 = arith.constant 0 : index
    %c0_3 = arith.constant 0 : index
    %4 = vector.load %arg2[%c0_2, %c0_3] : memref<16x128xf32, #tpu.memory_space<vmem>>, vector<16x128xf32>
    %cst = arith.constant 0.000000e+00 : f32
    %5 = vector.broadcast %cst : f32 to vector<16x128xf32>
    %6 = arith.cmpf ogt, %3, %5 : vector<16x128xf32>
    %7 = arith.subf %3, %4 : vector<16x128xf32>
    %8 = math.absf %7 : vector<16x128xf32>
    %cst_4 = arith.constant 0.000000e+00 : f32
    %9 = vector.broadcast %cst_4 : f32 to vector<16x128xf32>
    %10 = arith.select %6, %8, %9 : vector<16x128xi1>, vector<16x128xf32>
    %cst_5 = arith.constant 1.000000e+00 : f32
    %cst_6 = arith.constant 0.000000e+00 : f32
    %11 = vector.broadcast %cst_5 : f32 to vector<16x128xf32>
    %12 = vector.broadcast %cst_6 : f32 to vector<16x128xf32>
    %13 = arith.select %6, %11, %12 : vector<16x128xi1>, vector<16x128xf32>
    %c0_7 = arith.constant 0 : index
    %c0_8 = arith.constant 0 : index
    %c0_9 = arith.constant 0 : index
    %14 = vector.load %arg4[%c0_7, %c0_8, %c0_9] : memref<1x8x128xf32, #tpu.memory_space<vmem>>, vector<1x8x128xf32>
    %15 = vector.shape_cast %10 : vector<16x128xf32> to vector<2x8x128xf32>
    %cst_10 = arith.constant dense<0.000000e+00> : vector<8x128xf32>
    %16 = vector.multi_reduction <add>, %15, %cst_10 [0] : vector<2x8x128xf32> to vector<8x128xf32>
    %17 = vector.shape_cast %16 : vector<8x128xf32> to vector<1x8x128xf32>
    %18 = arith.addf %14, %17 : vector<1x8x128xf32>
    %c0_11 = arith.constant 0 : index
    %c0_12 = arith.constant 0 : index
    %c0_13 = arith.constant 0 : index
    %19 = vector.load %arg4[%c0_11, %c0_12, %c0_13] : memref<1x8x128xf32, #tpu.memory_space<vmem>>, vector<1x8x128xf32>
    tpu.vector_store %arg4[%c0_11, %c0_12, %c0_13], %18 {strides = array<i32>} : memref<1x8x128xf32, #tpu.memory_space<vmem>>, vector<1x8x128xf32>,
    %c0_14 = arith.constant 0 : index
    %c0_15 = arith.constant 0 : index
    %c0_16 = arith.constant 0 : index
    %20 = vector.load %arg5[%c0_14, %c0_15, %c0_16] : memref<1x8x128xf32, #tpu.memory_space<vmem>>, vector<1x8x128xf32>
    %21 = vector.shape_cast %13 : vector<16x128xf32> to vector<2x8x128xf32>
    %cst_17 = arith.constant dense<0.000000e+00> : vector<8x128xf32>
    %22 = vector.multi_reduction <add>, %21, %cst_17 [0] : vector<2x8x128xf32> to vector<8x128xf32>
    %23 = vector.shape_cast %22 : vector<8x128xf32> to vector<1x8x128xf32>
    %24 = arith.addf %20, %23 : vector<1x8x128xf32>
    %c0_18 = arith.constant 0 : index
    %c0_19 = arith.constant 0 : index
    %c0_20 = arith.constant 0 : index
    %25 = vector.load %arg5[%c0_18, %c0_19, %c0_20] : memref<1x8x128xf32, #tpu.memory_space<vmem>>, vector<1x8x128xf32>
    tpu.vector_store %arg5[%c0_18, %c0_19, %c0_20], %24 {strides = array<i32>} : memref<1x8x128xf32, #tpu.memory_space<vmem>>, vector<1x8x128xf32>,
    return
  }
  func.func @transform_0(%arg0: i32, %arg1: i32) -> (i32, i32) {
    %c1_i32 = arith.constant 1 : i32
    %0 = arith.muli %arg0, %c1_i32 : i32
    %1 = arith.addi %0, %arg1 : i32
    %c0_i32 = arith.constant 0 : i32
    %2 = arith.minsi %1, %c0_i32 : i32
    %c0_i32_0 = arith.constant 0 : i32
    %c0_i32_1 = arith.constant 0 : i32
    return %2, %c0_i32_0 : i32, i32
  }
  func.func @transform_1(%arg0: i32, %arg1: i32) -> (i32, i32) {
    %c1_i32 = arith.constant 1 : i32
    %0 = arith.muli %arg0, %c1_i32 : i32
    %1 = arith.addi %0, %arg1 : i32
    %c0_i32 = arith.constant 0 : i32
    %2 = arith.minsi %1, %c0_i32 : i32
    %c0_i32_0 = arith.constant 0 : i32
    %c0_i32_1 = arith.constant 0 : i32
    return %2, %c0_i32_0 : i32, i32
  }
  func.func @transform_2(%arg0: i32, %arg1: i32) -> (i32, i32, i32) {
    %c0_i32 = arith.constant 0 : i32
    %c0_i32_0 = arith.constant 0 : i32
    %c0_i32_1 = arith.constant 0 : i32
    return %arg0, %c0_i32, %c0_i32_0 : i32, i32, i32
  }
  func.func @transform_3(%arg0: i32, %arg1: i32) -> (i32, i32, i32) {
    %c0_i32 = arith.constant 0 : i32
    %c0_i32_0 = arith.constant 0 : i32
    %c0_i32_1 = arith.constant 0 : i32
    return %arg0, %c0_i32, %c0_i32_0 : i32, i32, i32
  }
}

</mosaic_0001>

<llo_original>
// kernel: tpu_custom_call.1
$region0: #{tpu_custom_call.1}
  #allocation0 [shape = 'u32[]', space=smem, size = 0x4, offset = 0x4, fixed_abs, tag = 'smem constant byte address 0x4 - core index']
  #allocation1 [shape = 'u32[72,128]{1,0:T(1,128)}', space=vmem, size = 0x9000, scoped, tag = 'internal scratch']
  %s0 = inlined_call_operand.hbm [shape: f32[16,128], index: 0, kind: input, shape index: {}]
  %s1 = inlined_call_operand.hbm [shape: f32[16,128], index: 1, kind: input, shape index: {}]
  %s2 = inlined_call_operand.hbm [shape: f32[1,8,128], index: 2, kind: output, shape index: {0}]
  %s3 = inlined_call_operand.hbm [shape: f32[1,8,128], index: 3, kind: output, shape index: {1}]
  %4 = xla_tuple %s2, %s3
  %s5 = sld [smem:[#allocation0]]
  $region38: #{tpu_custom_call.1} parent=0
    _
  %s7 = ssub.s32 1, %s5
  %s8 = scalar_select 0, %s7, %s5
  $region1: #{tpu_custom_call.1} parent=0
    #allocation2 [shape = 'u8[8192]{0}', space=vmem, size = 0x2000, scoped, tag = 'input window, operand 0, single buffered']
    #allocation3 [shape = 's32[1]{0}', space=sflag, size = 0x4, scoped, tag = 'scoped memory for tpu_custom_call.1']
    #allocation4 [shape = 's32[1]{0}', space=sflag, size = 0x4, scoped, tag = 'scoped memory for tpu_custom_call.1']
    #allocation5 [shape = 'u8[8192]{0}', space=vmem, size = 0x2000, scoped, tag = 'input window, operand 1, single buffered']
    #allocation6 [shape = 's32[1]{0}', space=sflag, size = 0x4, scoped, tag = 'scoped memory for tpu_custom_call.1']
    #allocation7 [shape = 'u8[4096]{0}', space=vmem, size = 0x1000, scoped, tag = 'output window, operand 0, single buffered']
    #allocation8 [shape = 'u8[4096]{0}', space=vmem, size = 0x1000, scoped, tag = 'output window, operand 1, single buffered']
    #allocation9 [shape = 's32[1]{0}', space=sflag, size = 0x4, scoped, tag = 'scoped memory for tpu_custom_call.1']
    %9 = vsyncpa [#allocation3], 0
    %10 = vsyncpa [#allocation6], 0
    %11 = vsyncpa [#allocation4], 0
    %12 = vsyncpa [#allocation9], 0
    // Predicated region
    $region2: #{tpu_custom_call.1} parent=1 // pred_check
      _
    $region3: #{tpu_custom_call.1} parent=1 // pred_check_branch
      %14 = sbr.rel (0) target = $region5
    $region4: #{tpu_custom_call.1} parent=1 // pred_region
      %s15 = sadd.s32 0, 0
      %p16 = scmp.lt.s32.totalorder %s15, 0
      %s17 = scalar_select %p16, %s15, 0
      %s18 = smul.u32 2, %s17
      %20 = vsyncadd [#allocation3], 0
      %s21 = smul.addr %s18, 8
      %s22 = scalar_lea.hbm %s0, %s21
      %s23 = sshll.u32 %s22, 4
      %s24 = int_to_ptr.hbm [resolvable:$true] %s23
      %s25 = sshll.u32 [#allocation2], 4
      %s26 = int_to_ptr.vmem [resolvable:$true] %s25
      %31 = dma.hbm_to_vmem [thread:$0]  %s24, 256, %s26, [#allocation3], 128, 128, 8
    $region5: #{tpu_custom_call.1} parent=1 // pred_fallthru
      _
    // Predicated region
    $region6: #{tpu_custom_call.1} parent=1 // pred_check
      _
    $region7: #{tpu_custom_call.1} parent=1 // pred_check_branch
      %33 = sbr.rel (0) target = $region9
    $region8: #{tpu_custom_call.1} parent=1 // pred_region
      %s34 = sadd.s32 0, 0
      %p35 = scmp.lt.s32.totalorder %s34, 0
      %s36 = scalar_select %p35, %s34, 0
      %s37 = smul.u32 2, %s36
      %39 = vsyncadd [#allocation6], 0
      %s40 = smul.addr %s37, 8
      %s41 = scalar_lea.hbm %s1, %s40
      %s42 = sshll.u32 %s41, 4
      %s43 = int_to_ptr.hbm [resolvable:$true] %s42
      %s44 = sshll.u32 [#allocation5], 4
      %s45 = int_to_ptr.vmem [resolvable:$true] %s44
      %50 = dma.hbm_to_vmem [thread:$0]  %s43, 256, %s45, [#allocation6], 128, 128, 8
    $region9: #{tpu_custom_call.1} parent=1 // pred_fallthru
      _
    // Predicated region
    $region10: #{tpu_custom_call.1} parent=1 // pred_check
      _
    $region11: #{tpu_custom_call.1} parent=1 // pred_check_branch
      %52 = sbr.rel (0) target = $region13
    $region12: #{tpu_custom_call.1} parent=1 // pred_region
      %54 = dma.done [#allocation3], 256
    $region13: #{tpu_custom_call.1} parent=1 // pred_fallthru
      _
    // Predicated region
    $region14: #{tpu_custom_call.1} parent=1 // pred_check
      _
    $region15: #{tpu_custom_call.1} parent=1 // pred_check_branch
      %56 = sbr.rel (0) target = $region17
    $region16: #{tpu_custom_call.1} parent=1 // pred_region
      %58 = dma.done [#allocation6], 256
    $region17: #{tpu_custom_call.1} parent=1 // pred_fallthru
      _
    %s59 = sadd.s32 0, 0
    %p60 = scmp.lt.s32.totalorder %s59, 0
    %s61 = scalar_select %p60, %s59, 0
    %s62 = smul.u32 2, %s61
    %s63 = sadd.s32 0, 0
    %p64 = scmp.lt.s32.totalorder %s63, 0
    %s65 = scalar_select %p64, %s63, 0
    %s66 = smul.u32 2, %s65
    %p67 = scmp.eq.s32.totalorder 0, 0
    // Predicated region
    $region18: #{tpu_custom_call.1} parent=1 // pred_check
      %p68 = pneg %p67
    $region19: #{tpu_custom_call.1} parent=1 // pred_check_branch
      %70 = sbr.rel (%p68) target = $region21
    $region20: #{tpu_custom_call.1} parent=1 // pred_region
      %71 = vst [vmem:[#allocation7] sm:$0xff] 0.0
      %72 = vst [vmem:[#allocation8] sm:$0xff] 0.0
    $region21: #{tpu_custom_call.1} parent=1 // pred_fallthru
      _
    %v73 = vld [vmem:[#allocation5] sm:$0xff]
    %v74 = vld [vmem:[#allocation5 + $0x8] sm:$0xff]
    %v75 = vld [vmem:[#allocation2] sm:$0xff]
    %v76 = vld [vmem:[#allocation2 + $0x8] sm:$0xff]
    %vm77 = vcmp.gt.f32.partialorder %v73, 0.0
    %vm78 = vcmp.gt.f32.partialorder %v74, 0.0
    %v79 = vsub.f32 %v73, %v75
    %v80 = vsub.f32 %v74, %v76
    %v81 = vand.u32 2147483647, %v79
    %v82 = vand.u32 2147483647, %v80
    %v83 = vsel %vm77, %v81, 0.0
    %v84 = vsel %vm78, %v82, 0.0
    %v85 = vsel %vm77, 1.0, 0.0
    %v86 = vsel %vm78, 1.0, 0.0
    %v87 = vld [vmem:[#allocation7] sm:$0xff]
    %v88 = vadd.f32 %v83, %v84
    %v89 = vadd.f32 %v87, %v88
    %90 = vst [vmem:[#allocation7] sm:$0xff] %v89
    %v91 = vld [vmem:[#allocation8] sm:$0xff]
    %v92 = vadd.f32 %v85, %v86
    %v93 = vadd.f32 %v91, %v92
    %94 = vst [vmem:[#allocation8] sm:$0xff] %v93
    // Predicated region
    $region22: #{tpu_custom_call.1} parent=1 // pred_check
      _
    $region23: #{tpu_custom_call.1} parent=1 // pred_check_branch
      %96 = sbr.rel (0) target = $region25
    $region24: #{tpu_custom_call.1} parent=1 // pred_region
      %98 = vsyncadd [#allocation4], 0
      %s100 = sshll.u32 [#allocation7], 4
      %s101 = int_to_ptr.vmem [resolvable:$true] %s100
      %s102 = sshll.u32 %s2, 4
      %s103 = int_to_ptr.hbm [resolvable:$true] %s102
      %105 = dma.vmem_to_hbm [thread:$0]  %s101, 128, %s103, [#allocation4]
    $region25: #{tpu_custom_call.1} parent=1 // pred_fallthru
      _
    // Predicated region
    $region26: #{tpu_custom_call.1} parent=1 // pred_check
      _
    $region27: #{tpu_custom_call.1} parent=1 // pred_check_branch
      %107 = sbr.rel (0) target = $region29
    $region28: #{tpu_custom_call.1} parent=1 // pred_region
      %109 = vsyncadd [#allocation9], 0
      %s111 = sshll.u32 [#allocation8], 4
      %s112 = int_to_ptr.vmem [resolvable:$true] %s111
      %s113 = sshll.u32 %s3, 4
      %s114 = int_to_ptr.hbm [resolvable:$true] %s113
      %116 = dma.vmem_to_hbm [thread:$0]  %s112, 128, %s114, [#allocation9]
    $region29: #{tpu_custom_call.1} parent=1 // pred_fallthru
      _
    // Predicated region
    $region30: #{tpu_custom_call.1} parent=1 // pred_check
      _
    $region31: #{tpu_custom_call.1} parent=1 // pred_check_branch
      %118 = sbr.rel (0) target = $region33
    $region32: #{tpu_custom_call.1} parent=1 // pred_region
      %120 = dma.done [#allocation4], 128
    $region33: #{tpu_custom_call.1} parent=1 // pred_fallthru
      _
    // Predicated region
    $region34: #{tpu_custom_call.1} parent=1 // pred_check
      _
    $region35: #{tpu_custom_call.1} parent=1 // pred_check_branch
      %122 = sbr.rel (0) target = $region37
    $region36: #{tpu_custom_call.1} parent=1 // pred_region
      %124 = dma.done [#allocation9], 128
    $region37: #{tpu_custom_call.1} parent=1 // pred_fallthru
      _
    %125 = vsyncpa [#allocation3], 1
    %126 = vsyncpa [#allocation6], 1
    %127 = vsyncpa [#allocation4], 1
    %128 = vsyncpa [#allocation9], 1

</llo_original>
